<compile_context>
chip_gen: v7x
topology: tpu7x:2x2x1
jax: 0.10.0
libtpu: 0.0.40
codegen_flags: <defaults>
</compile_context>

<pallas_src>
import functools
import math

import jax
import jax.numpy as jnp
from jax.experimental import pallas as pl
from jax.experimental.pallas import tpu as pltpu


# ---------------- Kernel A: input FC + ReLU ----------------------------------
def _fc_relu_kernel(x_ref, w_ref, b_ref, o_ref):
    y = jnp.dot(x_ref[...], w_ref[...], preferred_element_type=jnp.float32)
    o_ref[...] = jnp.maximum(y + b_ref[...], 0.0)


def fc_relu(x, w, b):
    n = x.shape[0]
    nh = w.shape[1]
    # TODO(synk): add an M-tiled grid (parallel on v7x's 2 TCs) for very large
    # node counts; at the demo sizes a single block is optimal.
    return pl.pallas_call(
        _fc_relu_kernel,
        out_shape=jax.ShapeDtypeStruct((n, nh), jnp.float32),
    )(x, w, b)


# ---------------- Kernel B: full GCN stack + f_str in one call ----------------
def _gcn_stack_kernel(theta_ref, adj_ref, h0_ref, w_ref, fw_ref, fb_ref,
                      o_ref, h_scr, *, alpha, variant, nhidden):
    l = pl.program_id(0)
    nlayers = pl.num_programs(0)

    @pl.when(l == 0)
    def _():
        h_scr[...] = h0_ref[...]

    h = h_scr[...]
    h0 = h0_ref[...]
    hi = jnp.dot(adj_ref[...], h, preferred_element_type=jnp.float32)
    theta = theta_ref[l]                              # scalar from SMEM table

    r = (1.0 - alpha) * hi + alpha * h0
    w = w_ref[0]                                      # [fin, nh]
    if variant:
        # support = concat([hi, h0], axis=1) @ W  ==  hi @ W_top + h0 @ W_bot
        sw = (jnp.dot(hi, w[:nhidden, :], preferred_element_type=jnp.float32)
              + jnp.dot(h0, w[nhidden:, :], preferred_element_type=jnp.float32))
    else:
        sw = jnp.dot(r, w, preferred_element_type=jnp.float32)

    out = theta * sw + (1.0 - theta) * r + h          # residual=True
    h_new = jnp.maximum(out, 0.0)                     # act_fn = ReLU
    h_scr[...] = h_new

    @pl.when(l == nlayers - 1)                        # fuse f_str into last step
    def _():
        o_ref[...] = (jnp.dot(h_new, fw_ref[...],
                              preferred_element_type=jnp.float32) + fb_ref[...])


def gcn_stack(theta, adj, h0, w_stack, fstr_w, fstr_b, *, alpha, variant):
    n, nh = h0.shape
    nlayers, fin, _ = w_stack.shape
    kernel = functools.partial(_gcn_stack_kernel, alpha=alpha,
                               variant=variant, nhidden=nh)
    return pl.pallas_call(
        kernel,
        out_shape=jax.ShapeDtypeStruct((n, nh), jnp.float32),
        grid_spec=pltpu.PrefetchScalarGridSpec(
            num_scalar_prefetch=1,                    # theta table -> SMEM
            grid=(nlayers,),
            in_specs=[
                pl.BlockSpec((n, n), lambda l, th: (0, 0)),          # adj (resident)
                pl.BlockSpec((n, nh), lambda l, th: (0, 0)),         # h0 (resident)
                pl.BlockSpec((1, fin, nh), lambda l, th: (l, 0, 0)),  # per-layer W
                pl.BlockSpec((nh, nh), lambda l, th: (0, 0)),        # f_str W (resident)
                pl.BlockSpec((1, nh), lambda l, th: (0, 0)),         # f_str b (resident)
            ],
            out_specs=pl.BlockSpec((n, nh), lambda l, th: (0, 0)),
            scratch_shapes=[pltpu.VMEM((n, nh), jnp.float32)],       # running h
        ),
        compiler_params=pltpu.CompilerParams(
            dimension_semantics=("arbitrary",)),      # layers are sequential
    )(theta, adj, h0, w_stack, fstr_w, fstr_b)


# ---------------- deepGCN forward ---------------------------------------------
def deep_gcn_forward(params, x, adj, *, lamda, alpha, variant):
    # TODO(synk): F.dropout is identity in eval mode; fcs[1] (nhidden->nclass)
    # is dead code in the torch forward and is intentionally not instantiated.
    h0 = fc_relu(x, params["fc0_w"], params["fc0_b"])
    nlayers = params["conv_w"].shape[0]
    theta = jnp.array([min(1.0, math.log(lamda / (i + 1) + 1.0))
                       for i in range(nlayers)], jnp.float32)
    return gcn_stack(theta, adj, h0, params["conv_w"],
                     params["fstr_w"], params["fstr_b"],
                     alpha=alpha, variant=variant)


# ---------------- pure-JAX reference (correctness check) ----------------------
def deep_gcn_reference(params, x, adj, *, lamda, alpha, variant):
    hp = jax.lax.Precision.HIGHEST
    h0 = jnp.maximum(jnp.dot(x, params["fc0_w"], precision=hp)
                     + params["fc0_b"], 0.0)
    h = h0
    for i in range(params["conv_w"].shape[0]):
        theta = min(1.0, math.log(lamda / (i + 1) + 1.0))
        hi = jnp.dot(adj, h, precision=hp)
        if variant:
            support = jnp.concatenate([hi, h0], axis=1)
            r = (1.0 - alpha) * hi + alpha * h0
        else:
            support = (1.0 - alpha) * hi + alpha * h0
            r = support
        out = (theta * jnp.dot(support, params["conv_w"][i], precision=hp)
               + (1.0 - theta) * r + h)
        h = jnp.maximum(out, 0.0)
    return jnp.dot(h, params["fstr_w"], precision=hp) + params["fstr_b"]


# ---------------- params ------------------------------------------------------
def init_params(key, *, nfeat, nhidden, nlayers, variant):
    ks = jax.random.split(key, 6)
    fin = 2 * nhidden if variant else nhidden
    stdv = 1.0 / math.sqrt(nhidden)
    return {
        # torch Linear weights are [out, in]; stored here pre-transposed [in, out].
        "fc0_w": 0.05 * jax.random.normal(ks[0], (nfeat, nhidden), jnp.float32),
        "fc0_b": 0.05 * jax.random.normal(ks[1], (1, nhidden), jnp.float32),
        "conv_w": jax.random.uniform(ks[2], (nlayers, fin, nhidden), jnp.float32,
                                     minval=-stdv, maxval=stdv),
        "fstr_w": 0.05 * jax.random.normal(ks[3], (nhidden, nhidden), jnp.float32),
        "fstr_b": 0.05 * jax.random.normal(ks[4], (1, nhidden), jnp.float32),
    }


if __name__ == "__main__":
    N = 64          # nodes
    NFEAT = 256
    NHIDDEN = 128   # lane-dense hidden width
    NLAYERS = 4
    LAMDA = 0.5
    ALPHA = 0.1
    VARIANT = True

    key = jax.random.PRNGKey(0)
    kp, kx, ka = jax.random.split(key, 3)

    params = init_params(kp, nfeat=NFEAT, nhidden=NHIDDEN,
                         nlayers=NLAYERS, variant=VARIANT)
    x = jax.random.normal(kx, (N, NFEAT), jnp.float32)

    # row-normalized random adjacency with self-loops (dense stand-in for spmm)
    a = (jax.random.uniform(ka, (N, N)) < 0.1).astype(jnp.float32)
    a = a + jnp.eye(N, dtype=jnp.float32)
    adj = a / jnp.sum(a, axis=1, keepdims=True)

    out = deep_gcn_forward(params, x, adj,
                           lamda=LAMDA, alpha=ALPHA, variant=VARIANT)
    out = jax.block_until_ready(out)

    assert out.shape == (N, NHIDDEN), out.shape
    assert bool(jnp.all(jnp.isfinite(out)))

    ref = deep_gcn_reference(params, x, adj,
                             lamda=LAMDA, alpha=ALPHA, variant=VARIANT)
    rel_err = float(jnp.max(jnp.abs(out - ref)) / (jnp.max(jnp.abs(ref)) + 1e-6))
    assert rel_err < 1e-2, rel_err

    print("KERNEL_OK")
</pallas_src>

<mosaic_0001>
module attributes {stable_mosaic.version = 11 : i64} {
  func.func @_fc_relu_kernel(%arg0: memref<64x256xf32, #tpu.memory_space<vmem>>, %arg1: memref<256x128xf32, #tpu.memory_space<vmem>>, %arg2: memref<1x128xf32, #tpu.memory_space<vmem>>, %arg3: memref<64x128xf32, #tpu.memory_space<vmem>>) attributes {dimension_semantics = [], scalar_prefetch = 0 : i64, scratch_operands = 0 : i64, tpu.core_type = #tpu.core_type<tc>} {
    %c0 = arith.constant 0 : index
    %c0_0 = arith.constant 0 : index
    %0 = vector.load %arg0[%c0, %c0_0] : memref<64x256xf32, #tpu.memory_space<vmem>>, vector<64x256xf32>
    %c0_1 = arith.constant 0 : index
    %c0_2 = arith.constant 0 : index
    %1 = vector.load %arg1[%c0_1, %c0_2] : memref<256x128xf32, #tpu.memory_space<vmem>>, vector<256x128xf32>
    %cst = arith.constant dense<0.000000e+00> : vector<64x128xf32>
    %2 = tpu.matmul %0, %1, %cst {dimension_numbers = #tpu.dot_dimension_numbers<[1], [0], [0], [1], [0, 0, 1, 1], [], []>} : vector<64x256xf32>, vector<256x128xf32>, vector<64x128xf32> -> vector<64x128xf32>
    %c0_3 = arith.constant 0 : index
    %c0_4 = arith.constant 0 : index
    %3 = vector.load %arg2[%c0_3, %c0_4] : memref<1x128xf32, #tpu.memory_space<vmem>>, vector<1x128xf32>
    %4 = vector.broadcast %3 : vector<1x128xf32> to vector<64x128xf32>
    %5 = arith.addf %2, %4 : vector<64x128xf32>
    %cst_5 = arith.constant 0.000000e+00 : f32
    %6 = vector.broadcast %cst_5 : f32 to vector<64x128xf32>
    %7 = arith.maximumf %5, %6 : vector<64x128xf32>
    %c0_6 = arith.constant 0 : index
    %c0_7 = arith.constant 0 : index
    %8 = vector.load %arg3[%c0_6, %c0_7] : memref<64x128xf32, #tpu.memory_space<vmem>>, vector<64x128xf32>
    tpu.vector_store %arg3[%c0_6, %c0_7], %7 {strides = array<i32>} : memref<64x128xf32, #tpu.memory_space<vmem>>, vector<64x128xf32>,
    return
  }
}

</mosaic_0001>

<llo_original>
// kernel: tpu_custom_call.1
$region0: #{tpu_custom_call.1}
  #allocation0 [shape = 'u32[]', space=smem, size = 0x4, offset = 0x4, fixed_abs, tag = 'smem constant byte address 0x4 - core index']
  #allocation1 [shape = 'u32[144,128]{1,0:T(1,128)}', space=vmem, size = 0x12000, scoped, tag = 'internal scratch']
  %s0 = inlined_call_operand.hbm [shape: f32[64,256], index: 0, kind: input, shape index: {}]
  %s1 = inlined_call_operand.hbm [shape: f32[256,128], index: 1, kind: input, shape index: {}]
  %s2 = inlined_call_operand.vmem [shape: f32[1,128], index: 2, kind: input, shape index: {}]
  %s3 = inlined_call_operand.hbm [shape: f32[64,128], index: 3, kind: output, shape index: {}]
  %s4 = sld [smem:[#allocation0]]
  $region30: #{tpu_custom_call.1} parent=0
    _
  %s6 = ssub.s32 1, %s4
  %s7 = scalar_select 0, %s6, %s4
  $region1: #{tpu_custom_call.1} parent=0
    #allocation2 [shape = 'u8[65536]{0}', space=vmem, size = 0x10000, scoped, tag = 'input window, operand 0, single buffered']
    #allocation3 [shape = 's32[1]{0}', space=sflag, size = 0x4, scoped, tag = 'scoped memory for tpu_custom_call.1']
    #allocation4 [shape = 's32[1]{0}', space=sflag, size = 0x4, scoped, tag = 'scoped memory for tpu_custom_call.1']
    #allocation5 [shape = 'u8[131072]{0}', space=vmem, size = 0x20000, scoped, tag = 'input window, operand 1, single buffered']
    #allocation6 [shape = 's32[1]{0}', space=sflag, size = 0x4, scoped, tag = 'scoped memory for tpu_custom_call.1']
    #allocation7 [shape = 'u8[32768]{0}', space=vmem, size = 0x8000, scoped, tag = 'output window, operand 0, single buffered']
    %8 = vsyncpa [#allocation3], 0
    %9 = vsyncpa [#allocation6], 0
    %10 = vsyncpa [#allocation4], 0
    // Predicated region
    $region2: #{tpu_custom_call.1} parent=1 // pred_check
      _
    $region3: #{tpu_custom_call.1} parent=1 // pred_check_branch
      %12 = sbr.rel (0) target = $region5
    $region4: #{tpu_custom_call.1} parent=1 // pred_region
      %s14 = ssub.s32 2048, 2048
      %15 = vsyncadd [#allocation3], %s14
      %s16 = sshll.u32 [#allocation2], 4
      %s17 = int_to_ptr.vmem [resolvable:$true] %s16
      %22 = dma.hbm_to_vmem [thread:$0]  %s0, 2048, %s17, [#allocation3], 256, 256, 16
    $region5: #{tpu_custom_call.1} parent=1 // pred_fallthru
      _
    // Predicated region
    $region6: #{tpu_custom_call.1} parent=1 // pred_check
      _
    $region7: #{tpu_custom_call.1} parent=1 // pred_check_branch
      %24 = sbr.rel (0) target = $region9
    $region8: #{tpu_custom_call.1} parent=1 // pred_region
      %s26 = ssub.s32 4096, 4096
      %27 = vsyncadd [#allocation6], %s26
      %s28 = sshll.u32 [#allocation5], 4
      %s29 = int_to_ptr.vmem [resolvable:$true] %s28
      %34 = dma.hbm_to_vmem [thread:$0]  %s1, 4096, %s29, [#allocation6], 128, 128, 8
    $region9: #{tpu_custom_call.1} parent=1 // pred_fallthru
      _
    // Predicated region
    $region10: #{tpu_custom_call.1} parent=1 // pred_check
      _
    $region11: #{tpu_custom_call.1} parent=1 // pred_check_branch
      %36 = sbr.rel (0) target = $region13
    $region12: #{tpu_custom_call.1} parent=1 // pred_region
      _
    $region13: #{tpu_custom_call.1} parent=1 // pred_fallthru
      _
    // Predicated region
    $region14: #{tpu_custom_call.1} parent=1 // pred_check
      _
    $region15: #{tpu_custom_call.1} parent=1 // pred_check_branch
      %38 = sbr.rel (0) target = $region17
    $region16: #{tpu_custom_call.1} parent=1 // pred_region
      %39 = dma.done [#allocation3], 2048
    $region17: #{tpu_custom_call.1} parent=1 // pred_fallthru
      _
    // Predicated region
    $region18: #{tpu_custom_call.1} parent=1 // pred_check
      _
    $region19: #{tpu_custom_call.1} parent=1 // pred_check_branch
      %41 = sbr.rel (0) target = $region21
    $region20: #{tpu_custom_call.1} parent=1 // pred_region
      %42 = dma.done [#allocation6], 4096
    $region21: #{tpu_custom_call.1} parent=1 // pred_fallthru
      _
    %v43 = vld [vmem:[#allocation2] sm:$0xff]
    %v44 = vld [vmem:[#allocation2 + $0x8] sm:$0xff]
    %v45 = vld [vmem:[#allocation2 + $0x10] sm:$0xff]
    %v46 = vld [vmem:[#allocation2 + $0x18] sm:$0xff]
    %v47 = vld [vmem:[#allocation2 + $0x20] sm:$0xff]
    %v48 = vld [vmem:[#allocation2 + $0x28] sm:$0xff]
    %v49 = vld [vmem:[#allocation2 + $0x30] sm:$0xff]
    %v50 = vld [vmem:[#allocation2 + $0x38] sm:$0xff]
    %v51 = vld [vmem:[#allocation2 + $0x40] sm:$0xff]
    %v52 = vld [vmem:[#allocation2 + $0x48] sm:$0xff]
    %v53 = vld [vmem:[#allocation2 + $0x50] sm:$0xff]
    %v54 = vld [vmem:[#allocation2 + $0x58] sm:$0xff]
    %v55 = vld [vmem:[#allocation2 + $0x60] sm:$0xff]
    %v56 = vld [vmem:[#allocation2 + $0x68] sm:$0xff]
    %v57 = vld [vmem:[#allocation2 + $0x70] sm:$0xff]
    %v58 = vld [vmem:[#allocation2 + $0x78] sm:$0xff]
    %v59 = vld [vmem:[#allocation5] sm:$0xff]
    %v60 = vld [vmem:[#allocation5 + $0x8] sm:$0xff]
    %v61 = vld [vmem:[#allocation5 + $0x10] sm:$0xff]
    %v62 = vld [vmem:[#allocation5 + $0x18] sm:$0xff]
    %v63 = vld [vmem:[#allocation5 + $0x20] sm:$0xff]
    %v64 = vld [vmem:[#allocation5 + $0x28] sm:$0xff]
    %v65 = vld [vmem:[#allocation5 + $0x30] sm:$0xff]
    %v66 = vld [vmem:[#allocation5 + $0x38] sm:$0xff]
    %v67 = vld [vmem:[#allocation5 + $0x40] sm:$0xff]
    %v68 = vld [vmem:[#allocation5 + $0x48] sm:$0xff]
    %v69 = vld [vmem:[#allocation5 + $0x50] sm:$0xff]
    %v70 = vld [vmem:[#allocation5 + $0x58] sm:$0xff]
    %v71 = vld [vmem:[#allocation5 + $0x60] sm:$0xff]
    %v72 = vld [vmem:[#allocation5 + $0x68] sm:$0xff]
    %v73 = vld [vmem:[#allocation5 + $0x70] sm:$0xff]
    %v74 = vld [vmem:[#allocation5 + $0x78] sm:$0xff]
    %v75 = vld [vmem:[#allocation5 + $0x80] sm:$0xff]
    %v76 = vld [vmem:[#allocation5 + $0x88] sm:$0xff]
    %v77 = vld [vmem:[#allocation5 + $0x90] sm:$0xff]
    %v78 = vld [vmem:[#allocation5 + $0x98] sm:$0xff]
    %v79 = vld [vmem:[#allocation5 + $0xa0] sm:$0xff]
    %v80 = vld [vmem:[#allocation5 + $0xa8] sm:$0xff]
    %v81 = vld [vmem:[#allocation5 + $0xb0] sm:$0xff]
    %v82 = vld [vmem:[#allocation5 + $0xb8] sm:$0xff]
    %v83 = vld [vmem:[#allocation5 + $0xc0] sm:$0xff]
    %v84 = vld [vmem:[#allocation5 + $0xc8] sm:$0xff]
    %v85 = vld [vmem:[#allocation5 + $0xd0] sm:$0xff]
    %v86 = vld [vmem:[#allocation5 + $0xd8] sm:$0xff]
    %v87 = vld [vmem:[#allocation5 + $0xe0] sm:$0xff]
    %v88 = vld [vmem:[#allocation5 + $0xe8] sm:$0xff]
    %v89 = vld [vmem:[#allocation5 + $0xf0] sm:$0xff]
    %v90 = vld [vmem:[#allocation5 + $0xf8] sm:$0xff]
    %v91 = vld [vmem:[%s2] sm:$0x1]
    %v93 = vlaneseq
    %v94 = vshrl.u32 %v93, 7
    %v95 = vsub.s32 0, %v94
    %v96 = vrot.slane %v91, %v95
    %98 = vmatprep.subr.mxu0 0.0
    %99 = vmatpush1.msra.mxu0 %v59
    %100 = vmatprep.subr.mxu0 0.0
    %101 = vmatpush1.msra.mxu0 %v60
    %102 = vmatprep.subr.mxu0 0.0
    %103 = vmatpush1.msra.mxu0 %v61
    %104 = vmatprep.subr.mxu0 0.0
    %105 = vmatpush1.msra.mxu0 %v62
    %106 = vmatprep.subr.mxu0 0.0
    %107 = vmatpush1.msra.mxu0 %v63
    %108 = vmatprep.subr.mxu0 0.0
    %109 = vmatpush1.msra.mxu0 %v64
    %110 = vmatprep.subr.mxu0 0.0
    %111 = vmatpush1.msra.mxu0 %v65
    %112 = vmatprep.subr.mxu0 0.0
    %113 = vmatpush1.msra.mxu0 %v66
    %114 = vmatprep.subr.mxu0 0.0
    %115 = vmatpush1.msra.mxu0 %v67
    %116 = vmatprep.subr.mxu0 0.0
    %117 = vmatpush1.msra.mxu0 %v68
    %118 = vmatprep.subr.mxu0 0.0
    %119 = vmatpush1.msra.mxu0 %v69
    %120 = vmatprep.subr.mxu0 0.0
    %121 = vmatpush1.msra.mxu0 %v70
    %122 = vmatprep.subr.mxu0 0.0
    %123 = vmatpush1.msra.mxu0 %v71
    %124 = vmatprep.subr.mxu0 0.0
    %125 = vmatpush1.msra.mxu0 %v72
    %126 = vmatprep.subr.mxu0 0.0
    %127 = vmatpush1.msra.mxu0 %v73
    %128 = vmatprep.subr.mxu0 0.0
    %129 = vmatpush1.msra.mxu0 %v74
    %130 = vmatprep.subr.mxu0 0.0
    %131 = vmatpush1.msra.mxu0 %v75
    %132 = vmatprep.subr.mxu0 0.0
    %133 = vmatpush1.msra.mxu0 %v76
    %134 = vmatprep.subr.mxu0 0.0
    %135 = vmatpush1.msra.mxu0 %v77
    %136 = vmatprep.subr.mxu0 0.0
    %137 = vmatpush1.msra.mxu0 %v78
    %138 = vmatprep.subr.mxu0 0.0
    %139 = vmatpush1.msra.mxu0 %v79
    %140 = vmatprep.subr.mxu0 0.0
    %141 = vmatpush1.msra.mxu0 %v80
    %142 = vmatprep.subr.mxu0 0.0
    %143 = vmatpush1.msra.mxu0 %v81
    %144 = vmatprep.subr.mxu0 0.0
    %145 = vmatpush1.msra.mxu0 %v82
    %146 = vmatprep.subr.mxu0 0.0
    %147 = vmatpush1.msra.mxu0 %v83
    %148 = vmatprep.subr.mxu0 0.0
    %149 = vmatpush1.msra.mxu0 %v84
    %150 = vmatprep.subr.mxu0 0.0
    %151 = vmatpush1.msra.mxu0 %v85
    %152 = vmatprep.subr.mxu0 0.0
    %153 = vmatpush1.msra.mxu0 %v86
    %154 = vmatprep.subr.mxu0 0.0
    %155 = vmatpush1.msra.mxu0 %v87
    %156 = vmatprep.subr.mxu0 0.0
    %157 = vmatpush1.msra.mxu0 %v88
    %158 = vmatprep.subr.mxu0 0.0
    %159 = vmatpush1.msra.mxu0 %v89
    %160 = vmatprep.subr.mxu0 0.0
    %161 = vmatpush1.msra.mxu0 %v90
    %162 = vmatprep.mubr.f32.mxu0 %v44
    %163 = vmatmul.mubr.f32.gmra.mrb[0].mxu0 %v43
    %v164 = vpop.f32.mrb[0].mxu0
    %v165 = vadd.f32 %v96, %v164
    %v166 = vpop.f32.mrb[0].mxu0
    %167 = vmatprep.mubr.f32.mxu0 %v46
    %168 = vmatmul.mubr.f32.gmra.mrb[0].mxu0 %v45
    %v169 = vpop.f32.mrb[0].mxu0
    %v170 = vadd.f32 %v96, %v169
    %v171 = vpop.f32.mrb[0].mxu0
    %172 = vmatprep.mubr.f32.mxu0 %v48
    %173 = vmatmul.mubr.f32.gmra.mrb[0].mxu0 %v47
    %v174 = vpop.f32.mrb[0].mxu0
    %v175 = vadd.f32 %v96, %v174
    %v176 = vpop.f32.mrb[0].mxu0
    %177 = vmatprep.mubr.f32.mxu0 %v50
    %178 = vmatmul.mubr.f32.gmra.mrb[0].mxu0 %v49
    %v179 = vpop.f32.mrb[0].mxu0
    %v180 = vadd.f32 %v96, %v179
    %v181 = vpop.f32.mrb[0].mxu0
    %182 = vmatprep.mubr.f32.mxu0 %v52
    %183 = vmatmul.mubr.f32.gmra.mrb[0].mxu0 %v51
    %v184 = vpop.f32.mrb[0].mxu0
    %v185 = vadd.f32 %v96, %v184
    %v186 = vpop.f32.mrb[0].mxu0
    %187 = vmatprep.mubr.f32.mxu0 %v54
    %188 = vmatmul.mubr.f32.gmra.mrb[0].mxu0 %v53
    %v189 = vpop.f32.mrb[0].mxu0
    %v190 = vadd.f32 %v96, %v189
    %v191 = vpop.f32.mrb[0].mxu0
    %192 = vmatprep.mubr.f32.mxu0 %v56
    %193 = vmatmul.mubr.f32.gmra.mrb[0].mxu0 %v55
    %v194 = vpop.f32.mrb[0].mxu0
    %v195 = vadd.f32 %v96, %v194
    %v196 = vpop.f32.mrb[0].mxu0
    %197 = vmatprep.mubr.f32.mxu0 %v58
    %198 = vmatmul.mubr.f32.gmra.mrb[0].mxu0 %v57
    %v199 = vpop.f32.mrb[0].mxu0
    %v200 = vadd.f32 %v96, %v199
    %v201 = vpop.f32.mrb[0].mxu0
    %202 = vdwg.mxu0
    %v203 = vmax.f32 %v165, 0.0
    %v204 = vmax.f32 %v170, 0.0
    %v205 = vmax.f32 %v175, 0.0
    %v206 = vmax.f32 %v180, 0.0
    %v207 = vmax.f32 %v185, 0.0
    %v208 = vmax.f32 %v190, 0.0
    %v209 = vmax.f32 %v195, 0.0
    %v210 = vmax.f32 %v200, 0.0
    %211 = vst [vmem:[#allocation7] sm:$0xff] %v203
    %212 = vst [vmem:[#allocation7 + $0x8] sm:$0xff] %v204
    %213 = vst [vmem:[#allocation7 + $0x10] sm:$0xff] %v205
    %214 = vst [vmem:[#allocation7 + $0x18] sm:$0xff] %v206
    %215 = vst [vmem:[#allocation7 + $0x20] sm:$0xff] %v207
    %216 = vst [vmem:[#allocation7 + $0x28] sm:$0xff] %v208
    %217 = vst [vmem:[#allocation7 + $0x30] sm:$0xff] %v209
    %218 = vst [vmem:[#allocation7 + $0x38] sm:$0xff] %v210
    // Predicated region
    $region22: #{tpu_custom_call.1} parent=1 // pred_check
      _
    $region23: #{tpu_custom_call.1} parent=1 // pred_check_branch
      %220 = sbr.rel (0) target = $region25
    $region24: #{tpu_custom_call.1} parent=1 // pred_region
      %s222 = ssub.s32 1024, 1024
      %223 = vsyncadd [#allocation4], %s222
      %s224 = sshll.u32 [#allocation7], 4
      %s225 = int_to_ptr.vmem [resolvable:$true] %s224
      %230 = dma.vmem_to_hbm [thread:$0]  %s225, 1024, %s3, [#allocation4], 128, 128, 8
    $region25: #{tpu_custom_call.1} parent=1 // pred_fallthru
      _
    // Predicated region
    $region26: #{tpu_custom_call.1} parent=1 // pred_check
      _
    $region27: #{tpu_custom_call.1} parent=1 // pred_check_branch
      %232 = sbr.rel (0) target = $region29
    $region28: #{tpu_custom_call.1} parent=1 // pred_region
      %233 = dma.done [#allocation4], 1024
    $region29: #{tpu_custom_call.1} parent=1 // pred_fallthru
      _
    %234 = vsyncpa [#allocation3], 1
    %235 = vsyncpa [#allocation6], 1
    %236 = vsyncpa [#allocation4], 1

</llo_original>
